<compile_context>
chip_gen: v7x
topology: tpu7x:2x2x1
jax: 0.10.0
libtpu: 0.0.40
codegen_flags: <defaults>
</compile_context>

<pallas_src>
import math

import jax
import jax.numpy as jnp
from jax import lax
from jax.experimental import pallas as pl
from jax.experimental.pallas import tpu as pltpu


def _round_up(n, m):
    return ((n + m - 1) // m) * m


def _mlp_kernel(x_ref, w1_ref, b1_ref, w2_ref, b2_ref, w3_ref, b3_ref, o_ref):
    """Fused 3-layer MLP forward for one batch tile.

    x_ref : (TB, D)   input dtype (cast to the compute dtype in-register)
    w1_ref: (D, 64)   compute dtype      b1_ref: (1, 64) f32
    w2_ref: (64, 32)  compute dtype      b2_ref: (1, 32) f32
    w3_ref: (1, 32)   compute dtype      b3_ref: (1, 1)  f32 (SMEM)
    o_ref : (1, TB)   f32 lane-dense output row
    """
    # In-kernel cast (VPU op, hidden under the x DMA) instead of a wrapper-side HBM pass.
    x = x_ref[...].astype(w1_ref.dtype)

    # Layer 1: MXU matmul with f32 accumulation, bias add + ReLU on the VPU.
    h1 = jnp.dot(x, w1_ref[...], preferred_element_type=jnp.float32) + b1_ref[...]
    h1 = jnp.maximum(h1, 0.0)

    # Layer 2.
    h2 = jnp.dot(h1.astype(w2_ref.dtype), w2_ref[...],
                 preferred_element_type=jnp.float32) + b2_ref[...]
    h2 = jnp.maximum(h2, 0.0)

    # Layer 3 (32 -> 1): contract w3 (1,32) against h2 (TB,32) on the feature dim so the
    # result comes out as a lane-dense (1, TB) row (no 1-wide masked column stores).
    out = lax.dot_general(w3_ref[...], h2.astype(w3_ref.dtype),
                          dimension_numbers=(((1,), (1,)), ((), ())),
                          preferred_element_type=jnp.float32)
    o_ref[...] = (out + b3_ref[0, 0]).astype(o_ref.dtype)


def _vmem_limit_bytes():
    """Per-generation scoped-VMEM limit: ~3/4 of physical, capped at 96 MiB."""
    try:
        cap = int(pltpu.get_tpu_info().vmem_capacity_bytes)
    except Exception:
        cap = 64 * 1024 * 1024          # conservative fallback (v7x-sized)
    return int(min(cap * 3 // 4, 96 * 1024 * 1024))


def _choose_batch_tile(B, D, x_itemsize, batch_tile, vmem_limit):
    """Batch tile: multiple of 128, MiB-scale, VMEM-accounted, >=4 grid steps if possible."""
    if B < 128:
        return 128
    tile_budget = max(2 * 1024 * 1024, vmem_limit // 2)
    # Per batch row: double-buffered x tile + double-buffered (8-sublane-padded) f32 out row.
    per_row = 2 * D * x_itemsize + 2 * 8 * 4
    max_tb = max(128, (tile_budget // per_row) // 128 * 128)
    tb = max(128, min(batch_tile, max_tb) // 128 * 128)
    if B >= 4 * 128:
        # Keep >= 4 grid steps: the "parallel" batch axis shards across both v7x TCs and
        # each core still double-buffers its DMAs.
        tb = min(tb, _round_up(pl.cdiv(B, 4), 128))
    else:
        tb = 128
    return tb


def mlp_forward(x, params, *, batch_tile=32768, compute_dtype=jnp.bfloat16):
    """Run the fused MLP Pallas kernel over the batch dimension. Returns (B, 1) f32."""
    w1, b1, w2, b2, w3, b3 = params
    B, D = x.shape
    x_itemsize = jnp.dtype(x.dtype).itemsize

    vmem_limit = _vmem_limit_bytes()
    tb = _choose_batch_tile(B, D, x_itemsize, batch_tile, vmem_limit)

    # No wrapper-side cast or full pad of x.  Only a tiny batch (< one tile) is padded so
    # the batch block never exceeds the array; larger ragged batches use a partial last
    # block handled by Pallas (OOB rows are garbage and sliced off below).
    x_in = jnp.pad(x, ((0, tb - B), (0, 0))) if B < tb else x
    Bx = x_in.shape[0]
    grid = pl.cdiv(Bx, tb)
    Bp = grid * tb

    # Weights in the compute dtype (tiny, stay resident in VMEM); biases f32 for epilogue.
    # TODO(synk): for very large input_dim, load W1 once via a manual copy instead of a
    # (double-buffered) replicated BlockSpec; negligible for D in the tens.
    w1c = w1.astype(compute_dtype)
    w2c = w2.astype(compute_dtype)
    w3c = w3.reshape(1, -1).astype(compute_dtype)          # (1, 32)
    b1f = b1.reshape(1, -1).astype(jnp.float32)
    b2f = b2.reshape(1, -1).astype(jnp.float32)
    b3f = b3.reshape(1, 1).astype(jnp.float32)

    cdt_size = jnp.dtype(compute_dtype).itemsize
    flops = 2 * Bp * (D * 64 + 64 * 32 + 32)
    bytes_accessed = (Bp * D * x_itemsize + Bp * 4
                      + (w1c.size + w2c.size + w3c.size) * cdt_size
                      + (b1f.size + b2f.size + b3f.size) * 4)
    cost = pl.CostEstimate(flops=flops, transcendentals=0, bytes_accessed=bytes_accessed)

    def _resident(arr):
        # Full-array block, same block index every step -> no re-DMA, stays in VMEM.
        return pl.BlockSpec(arr.shape, lambda i: (0,) * arr.ndim)

    out_row = pl.pallas_call(
        _mlp_kernel,
        out_shape=jax.ShapeDtypeStruct((1, Bp), jnp.float32),
        grid_spec=pltpu.PrefetchScalarGridSpec(
            num_scalar_prefetch=0,
            grid=(grid,),
            in_specs=[
                pl.BlockSpec((tb, D), lambda i: (i, 0)),            # x tile (streamed)
                _resident(w1c),                                     # (D, 64)
                _resident(b1f),                                     # (1, 64)
                _resident(w2c),                                     # (64, 32)
                _resident(b2f),                                     # (1, 32)
                _resident(w3c),                                     # (1, 32)
                pl.BlockSpec(memory_space=pltpu.MemorySpace.SMEM),  # b3 scalar in SMEM
            ],
            out_specs=pl.BlockSpec((1, tb), lambda i: (0, i)),      # lane-dense output row
        ),
        compiler_params=pltpu.CompilerParams(
            dimension_semantics=("parallel",),   # batch tiles shard across TCs (v7x megacore)
            vmem_limit_bytes=vmem_limit,
        ),
        cost_estimate=cost,
    )(x_in, w1c, b1f, w2c, b2f, w3c, b3f)

    return out_row[0, :B].reshape(B, 1)


def init_params(key, input_dim):
    """Deterministic init mimicking torch.nn.Linear (uniform(-1/sqrt(in), 1/sqrt(in)))."""
    dims = [(input_dim, 64), (64, 32), (32, 1)]
    params = []
    for fan_in, fan_out in dims:
        kw, kb, key = jax.random.split(key, 3)
        bound = 1.0 / math.sqrt(fan_in)
        w = jax.random.uniform(kw, (fan_in, fan_out), jnp.float32, -bound, bound)
        b = jax.random.uniform(kb, (1, fan_out), jnp.float32, -bound, bound)
        params += [w, b]
    return tuple(params)


def reference_forward(x, params):
    """Pure-JAX f32 reference of the PyTorch forward pass."""
    w1, b1, w2, b2, w3, b3 = params
    h1 = jnp.maximum(x @ w1 + b1, 0.0)
    h2 = jnp.maximum(h1 @ w2 + b2, 0.0)
    return h2 @ w3 + b3


if __name__ == "__main__":
    key = jax.random.PRNGKey(0)
    kp, kx1, kx2, kx3 = jax.random.split(key, 4)

    input_dim = 32
    params = init_params(kp, input_dim)

    # Case 1: multi-tile batch (grid of 4: pipelining, parallel batch axis, dense output).
    x1 = jax.random.normal(kx1, (512, input_dim), jnp.float32)
    ref1 = reference_forward(x1, params)

    out_f32 = jax.block_until_ready(mlp_forward(x1, params, compute_dtype=jnp.float32))
    assert out_f32.shape == (512, 1)
    assert jnp.allclose(out_f32, ref1, atol=1e-4, rtol=1e-4), "f32 mismatch vs reference"

    out_bf16 = jax.block_until_ready(mlp_forward(x1, params))
    assert out_bf16.shape == (512, 1)
    assert jnp.allclose(out_bf16, ref1, atol=5e-2, rtol=5e-2), "bf16 mismatch vs reference"

    # Case 2: ragged batch (partial last tile handled in-kernel, no wrapper pad).
    x2 = jax.random.normal(kx2, (300, input_dim), jnp.float32)
    out2 = jax.block_until_ready(mlp_forward(x2, params))
    assert out2.shape == (300, 1)
    assert jnp.allclose(out2, reference_forward(x2, params), atol=5e-2, rtol=5e-2), \
        "ragged-batch mismatch"

    # Case 3: tiny batch (< one tile; only case that uses the cheap wrapper pad).
    x3 = jax.random.normal(kx3, (20, input_dim), jnp.float32)
    out3 = jax.block_until_ready(mlp_forward(x3, params))
    assert out3.shape == (20, 1)
    assert jnp.allclose(out3, reference_forward(x3, params), atol=5e-2, rtol=5e-2), \
        "tiny-batch mismatch"

    print("KERNEL_OK")
</pallas_src>

<mosaic_0001>
module attributes {stable_mosaic.version = 11 : i64} {
  func.func @_mlp_kernel(%arg0: i32, %arg1: memref<128x32xf32, #tpu.memory_space<vmem>>, %arg2: memref<32x64xf32, #tpu.memory_space<vmem>>, %arg3: memref<1x64xf32, #tpu.memory_space<vmem>>, %arg4: memref<64x32xf32, #tpu.memory_space<vmem>>, %arg5: memref<1x32xf32, #tpu.memory_space<vmem>>, %arg6: memref<1x32xf32, #tpu.memory_space<vmem>>, %arg7: memref<1x1xf32, #tpu.memory_space<smem>>, %arg8: memref<1x128xf32, #tpu.memory_space<vmem>>) attributes {dimension_semantics = [#tpu.dimension_semantics<parallel>], iteration_bounds = array<i64: 4>, scalar_prefetch = 0 : i64, scratch_operands = 0 : i64, tpu.core_type = #tpu.core_type<tc>, window_params = [{transform_indices = @transform_0, window_bounds = array<i64: 128, 32>}, {pipeline_mode = #tpu.pipeline_mode<synchronous>, transform_indices = @transform_1, window_bounds = array<i64: 32, 64>}, {pipeline_mode = #tpu.pipeline_mode<synchronous>, transform_indices = @transform_2, window_bounds = array<i64: 1, 64>}, {pipeline_mode = #tpu.pipeline_mode<synchronous>, transform_indices = @transform_3, window_bounds = array<i64: 64, 32>}, {pipeline_mode = #tpu.pipeline_mode<synchronous>, transform_indices = @transform_4, window_bounds = array<i64: 1, 32>}, {pipeline_mode = #tpu.pipeline_mode<synchronous>, transform_indices = @transform_5, window_bounds = array<i64: 1, 32>}, {transform_indices = @transform_6, window_bounds = array<i64: 1, 1>}, {transform_indices = @transform_7, window_bounds = array<i64: 1, 128>}]} {
    %c0 = arith.constant 0 : index
    %c0_0 = arith.constant 0 : index
    %0 = vector.load %arg1[%c0, %c0_0] : memref<128x32xf32, #tpu.memory_space<vmem>>, vector<128x32xf32>
    %c0_1 = arith.constant 0 : index
    %c0_2 = arith.constant 0 : index
    %1 = vector.load %arg2[%c0_1, %c0_2] : memref<32x64xf32, #tpu.memory_space<vmem>>, vector<32x64xf32>
    %cst = arith.constant dense<0.000000e+00> : vector<128x64xf32>
    %2 = tpu.matmul %0, %1, %cst {dimension_numbers = #tpu.dot_dimension_numbers<[1], [0], [0], [1], [0, 0, 1, 1], [], []>} : vector<128x32xf32>, vector<32x64xf32>, vector<128x64xf32> -> vector<128x64xf32>
    %c0_3 = arith.constant 0 : index
    %c0_4 = arith.constant 0 : index
    %3 = vector.load %arg3[%c0_3, %c0_4] : memref<1x64xf32, #tpu.memory_space<vmem>>, vector<1x64xf32>
    %4 = vector.broadcast %3 : vector<1x64xf32> to vector<128x64xf32>
    %5 = arith.addf %2, %4 : vector<128x64xf32>
    %cst_5 = arith.constant 0.000000e+00 : f32
    %6 = vector.broadcast %cst_5 : f32 to vector<128x64xf32>
    %7 = arith.maximumf %5, %6 : vector<128x64xf32>
    %c0_6 = arith.constant 0 : index
    %c0_7 = arith.constant 0 : index
    %8 = vector.load %arg4[%c0_6, %c0_7] : memref<64x32xf32, #tpu.memory_space<vmem>>, vector<64x32xf32>
    %cst_8 = arith.constant dense<0.000000e+00> : vector<128x32xf32>
    %9 = tpu.matmul %7, %8, %cst_8 {dimension_numbers = #tpu.dot_dimension_numbers<[1], [0], [0], [1], [0, 0, 1, 1], [], []>} : vector<128x64xf32>, vector<64x32xf32>, vector<128x32xf32> -> vector<128x32xf32>
    %c0_9 = arith.constant 0 : index
    %c0_10 = arith.constant 0 : index
    %10 = vector.load %arg5[%c0_9, %c0_10] : memref<1x32xf32, #tpu.memory_space<vmem>>, vector<1x32xf32>
    %11 = vector.broadcast %10 : vector<1x32xf32> to vector<128x32xf32>
    %12 = arith.addf %9, %11 : vector<128x32xf32>
    %cst_11 = arith.constant 0.000000e+00 : f32
    %13 = vector.broadcast %cst_11 : f32 to vector<128x32xf32>
    %14 = arith.maximumf %12, %13 : vector<128x32xf32>
    %c0_12 = arith.constant 0 : index
    %c0_13 = arith.constant 0 : index
    %15 = vector.load %arg6[%c0_12, %c0_13] : memref<1x32xf32, #tpu.memory_space<vmem>>, vector<1x32xf32>
    %cst_14 = arith.constant dense<0.000000e+00> : vector<1x128xf32>
    %16 = tpu.matmul %15, %14, %cst_14 {dimension_numbers = #tpu.dot_dimension_numbers<[1], [1], [0], [0], [0, 0, 1, 0], [], []>} : vector<1x32xf32>, vector<128x32xf32>, vector<1x128xf32> -> vector<1x128xf32>
    %c0_15 = arith.constant 0 : index
    %c0_16 = arith.constant 0 : index
    %17 = memref.load %arg7[%c0_15, %c0_16] : memref<1x1xf32, #tpu.memory_space<smem>>
    %18 = vector.broadcast %17 : f32 to vector<1x128xf32>
    %19 = arith.addf %16, %18 : vector<1x128xf32>
    %c0_17 = arith.constant 0 : index
    %c0_18 = arith.constant 0 : index
    %20 = vector.load %arg8[%c0_17, %c0_18] : memref<1x128xf32, #tpu.memory_space<vmem>>, vector<1x128xf32>
    tpu.vector_store %arg8[%c0_17, %c0_18], %19 {strides = array<i32>} : memref<1x128xf32, #tpu.memory_space<vmem>>, vector<1x128xf32>,
    return
  }
  func.func @transform_0(%arg0: i32) -> (i32, i32) {
    %c0_i32 = arith.constant 0 : i32
    %c0_i32_0 = arith.constant 0 : i32
    return %arg0, %c0_i32 : i32, i32
  }
  func.func @transform_1(%arg0: i32) -> (i32, i32) {
    %c0_i32 = arith.constant 0 : i32
    %c0_i32_0 = arith.constant 0 : i32
    %c0_i32_1 = arith.constant 0 : i32
    return %c0_i32, %c0_i32_0 : i32, i32
  }
  func.func @transform_2(%arg0: i32) -> (i32, i32) {
    %c0_i32 = arith.constant 0 : i32
    %c0_i32_0 = arith.constant 0 : i32
    %c0_i32_1 = arith.constant 0 : i32
    return %c0_i32, %c0_i32_0 : i32, i32
  }
  func.func @transform_3(%arg0: i32) -> (i32, i32) {
    %c0_i32 = arith.constant 0 : i32
    %c0_i32_0 = arith.constant 0 : i32
    %c0_i32_1 = arith.constant 0 : i32
    return %c0_i32, %c0_i32_0 : i32, i32
  }
  func.func @transform_4(%arg0: i32) -> (i32, i32) {
    %c0_i32 = arith.constant 0 : i32
    %c0_i32_0 = arith.constant 0 : i32
    %c0_i32_1 = arith.constant 0 : i32
    return %c0_i32, %c0_i32_0 : i32, i32
  }
  func.func @transform_5(%arg0: i32) -> (i32, i32) {
    %c0_i32 = arith.constant 0 : i32
    %c0_i32_0 = arith.constant 0 : i32
    %c0_i32_1 = arith.constant 0 : i32
    return %c0_i32, %c0_i32_0 : i32, i32
  }
  func.func @transform_6(%arg0: i32) -> (i32, i32) {
    %c0_i32 = arith.constant 0 : i32
    %c0_i32_0 = arith.constant 0 : i32
    %c0_i32_1 = arith.constant 0 : i32
    return %c0_i32, %c0_i32_0 : i32, i32
  }
  func.func @transform_7(%arg0: i32) -> (i32, i32) {
    %c0_i32 = arith.constant 0 : i32
    %c0_i32_0 = arith.constant 0 : i32
    return %c0_i32, %arg0 : i32, i32
  }
}

</mosaic_0001>

<llo_original>
// kernel: tpu_custom_call.1
$region0: #{tpu_custom_call.1}
  #allocation0 [shape = 'u32[]', space=smem, size = 0x4, offset = 0x4, fixed_abs, tag = 'smem constant byte address 0x4 - core index']
  #allocation1 [shape = 'u32[144,128]{1,0:T(1,128)}', space=vmem, size = 0x12000, scoped, tag = 'internal scratch']
  #allocation2 [shape = 'f32[1,1]{1,0:T(1,128)S(6)}', space=smem, size = 0x200, scoped, tag = 'scoped memory for tpu_custom_call.1']
  %s0 = inlined_call_operand.vmem [shape: f32[512,32], index: 0, kind: input, shape index: {}]
  %s1 = inlined_call_operand.vmem [shape: f32[32,64], index: 1, kind: input, shape index: {}]
  %s2 = inlined_call_operand.vmem [shape: f32[1,64], index: 2, kind: input, shape index: {}]
  %s3 = inlined_call_operand.vmem [shape: f32[64,32], index: 3, kind: input, shape index: {}]
  %s4 = inlined_call_operand.vmem [shape: f32[1,32], index: 4, kind: input, shape index: {}]
  %s5 = inlined_call_operand.vmem [shape: f32[1,32], index: 5, kind: input, shape index: {}]
  %s6 = inlined_call_operand.<no memory space> [shape: f32[1,1], index: 6, kind: input, shape index: {}]
  %s7 = inlined_call_operand.hbm [shape: f32[1,512], index: 7, kind: output, shape index: {}]
  %s8 = sld [smem:[#allocation0]]
  $region61: #{tpu_custom_call.1} parent=0
    _
  %s10 = ssub.s32 1, %s8
  %s11 = scalar_select 0, %s10, %s8
  %12 = sst [smem:[#allocation2]] %s6
  $region1: #{tpu_custom_call.1} parent=0
    #allocation3 [shape = 'u8[1024]{0}', space=vmem, size = 0x400, scoped, tag = 'output window, operand 0']
    #allocation4 [shape = 's32[2]{0}', space=sflag, size = 0x8, scoped, tag = 'scoped memory for tpu_custom_call.1']
    %13 = vsyncpa [#allocation4], 0
    %s14 = scalar_lea.sflag [#allocation4], 1
    %15 = vsyncpa %s14, 0
    loop: start=0, step=1, limit=6
    $region2: #{tpu_custom_call.1} parent=1 // loop_pre_header
      _
    $region3: #{tpu_custom_call.1} parent=1 // loop_header
      %s17 = sphi 0, %s21
      %p18 = scmp.ge.s32.totalorder %s17, 6
      %s27 = sphi 0, %s29
      %s30 = sphi 0, %s27
      %s31 = sphi 0, %s30
      %s47 = sphi 0, %s31
      %s51 = sphi 0, %s51
      %s53 = sphi 0, %s51
      %s54 = sphi 0, %s53
      %s68 = sphi 0, %s54
      %s72 = sphi 0, %s72
      %s74 = sphi 0, %s72
      %s75 = sphi 0, %s74
      %s89 = sphi 0, %s75
      %s93 = sphi 0, %s93
      %s95 = sphi 0, %s93
      %s96 = sphi 0, %s95
      %s110 = sphi 0, %s96
      %s114 = sphi 0, %s114
      %s116 = sphi 0, %s114
      %s117 = sphi 0, %s116
      %s131 = sphi 0, %s117
      %s135 = sphi 0, %s135
      %s137 = sphi 0, %s135
      %s138 = sphi 0, %s137
      %s152 = sphi 0, %s138
      %s156 = sphi 0, %s156
      %s158 = sphi 0, %s156
      %s159 = sphi 0, %s158
      %s173 = sphi 0, %s159
      %s179 = sphi 0, %s181
      %s182 = sphi 0, %s179
      %s183 = sphi 0, %s182
      %s199 = sphi 0, %s183
    $region4: #{tpu_custom_call.1} parent=1 // loop_header_branch
      %20 = sbr.rel (%p18) target = $region8
    $region5: #{tpu_custom_call.1} parent=1 // loop_body
      %s22 = ssub.s32 %s17, 1
      %s23 = ssub.s32 %s17, 2
      %s24 = sadd.s32 %s17, 1
      %s25 = ssub.s32 %s17, %s24
      %p26 = scmp.eq.s32.totalorder %s25, 0
      %s28 = sadd.s32 %s27, 1
      %s29 = scalar_select %p26, %s27, %s28
      %p32 = pneg %p26
      %p33 = scmp.eq.s32.totalorder %s17, 3
      %p34 = por %p32, %p33
      %p35 = scmp.ne.s32.totalorder %s27, %s30
      %p36 = scmp.eq.s32.totalorder %s17, 0
      %p37 = por %p35, %p36
      %p38 = scmp.ne.s32.totalorder %s27, %s30
      %p39 = scmp.eq.s32.totalorder %s22, 3
      %p40 = por %p38, %p39
      %p41 = scmp.ne.s32.totalorder %s30, %s31
      %p42 = scmp.eq.s32.totalorder %s22, 0
      %p43 = por %p41, %p42
      %p44 = scmp.ne.s32.totalorder %s30, %s31
      %p45 = scmp.eq.s32.totalorder %s23, 3
      %p46 = por %p44, %p45
      %p48 = scmp.ne.s32.totalorder %s31, %s47
      %p49 = scmp.eq.s32.totalorder %s23, 0
      %p50 = por %p48, %p49
      %s52 = sadd.s32 %s51, 1
      %p55 = scmp.eq.s32.totalorder %s17, 3
      %p56 = scmp.ne.s32.totalorder %s51, %s53
      %p57 = scmp.eq.s32.totalorder %s17, 0
      %p58 = por %p56, %p57
      %p59 = scmp.ne.s32.totalorder %s51, %s53
      %p60 = scmp.eq.s32.totalorder %s22, 3
      %p61 = por %p59, %p60
      %p62 = scmp.ne.s32.totalorder %s53, %s54
      %p63 = scmp.eq.s32.totalorder %s22, 0
      %p64 = por %p62, %p63
      %p65 = scmp.ne.s32.totalorder %s53, %s54
      %p66 = scmp.eq.s32.totalorder %s23, 3
      %p67 = por %p65, %p66
      %p69 = scmp.ne.s32.totalorder %s54, %s68
      %p70 = scmp.eq.s32.totalorder %s23, 0
      %p71 = por %p69, %p70
      %s73 = sadd.s32 %s72, 1
      %p76 = scmp.eq.s32.totalorder %s17, 3
      %p77 = scmp.ne.s32.totalorder %s72, %s74
      %p78 = scmp.eq.s32.totalorder %s17, 0
      %p79 = por %p77, %p78
      %p80 = scmp.ne.s32.totalorder %s72, %s74
      %p81 = scmp.eq.s32.totalorder %s22, 3
      %p82 = por %p80, %p81
      %p83 = scmp.ne.s32.totalorder %s74, %s75
      %p84 = scmp.eq.s32.totalorder %s22, 0
      %p85 = por %p83, %p84
      %p86 = scmp.ne.s32.totalorder %s74, %s75
      %p87 = scmp.eq.s32.totalorder %s23, 3
      %p88 = por %p86, %p87
      %p90 = scmp.ne.s32.totalorder %s75, %s89
      %p91 = scmp.eq.s32.totalorder %s23, 0
      %p92 = por %p90, %p91
      %s94 = sadd.s32 %s93, 1
      %p97 = scmp.eq.s32.totalorder %s17, 3
      %p98 = scmp.ne.s32.totalorder %s93, %s95
      %p99 = scmp.eq.s32.totalorder %s17, 0
      %p100 = por %p98, %p99
      %p101 = scmp.ne.s32.totalorder %s93, %s95
      %p102 = scmp.eq.s32.totalorder %s22, 3
      %p103 = por %p101, %p102
      %p104 = scmp.ne.s32.totalorder %s95, %s96
      %p105 = scmp.eq.s32.totalorder %s22, 0
      %p106 = por %p104, %p105
      %p107 = scmp.ne.s32.totalorder %s95, %s96
      %p108 = scmp.eq.s32.totalorder %s23, 3
      %p109 = por %p107, %p108
      %p111 = scmp.ne.s32.totalorder %s96, %s110
      %p112 = scmp.eq.s32.totalorder %s23, 0
      %p113 = por %p111, %p112
      %s115 = sadd.s32 %s114, 1
      %p118 = scmp.eq.s32.totalorder %s17, 3
      %p119 = scmp.ne.s32.totalorder %s114, %s116
      %p120 = scmp.eq.s32.totalorder %s17, 0
      %p121 = por %p119, %p120
      %p122 = scmp.ne.s32.totalorder %s114, %s116
      %p123 = scmp.eq.s32.totalorder %s22, 3
      %p124 = por %p122, %p123
      %p125 = scmp.ne.s32.totalorder %s116, %s117
      %p126 = scmp.eq.s32.totalorder %s22, 0
      %p127 = por %p125, %p126
      %p128 = scmp.ne.s32.totalorder %s116, %s117
      %p129 = scmp.eq.s32.totalorder %s23, 3
      %p130 = por %p128, %p129
      %p132 = scmp.ne.s32.totalorder %s117, %s131
      %p133 = scmp.eq.s32.totalorder %s23, 0
      %p134 = por %p132, %p133
      %s136 = sadd.s32 %s135, 1
      %p139 = scmp.eq.s32.totalorder %s17, 3
      %p140 = scmp.ne.s32.totalorder %s135, %s137
      %p141 = scmp.eq.s32.totalorder %s17, 0
      %p142 = por %p140, %p141
      %p143 = scmp.ne.s32.totalorder %s135, %s137
      %p144 = scmp.eq.s32.totalorder %s22, 3
      %p145 = por %p143, %p144
      %p146 = scmp.ne.s32.totalorder %s137, %s138
      %p147 = scmp.eq.s32.totalorder %s22, 0
      %p148 = por %p146, %p147
      %p149 = scmp.ne.s32.totalorder %s137, %s138
      %p150 = scmp.eq.s32.totalorder %s23, 3
      %p151 = por %p149, %p150
      %p153 = scmp.ne.s32.totalorder %s138, %s152
      %p154 = scmp.eq.s32.totalorder %s23, 0
      %p155 = por %p153, %p154
      %s157 = sadd.s32 %s156, 1
      %p160 = scmp.eq.s32.totalorder %s17, 3
      %p161 = scmp.ne.s32.totalorder %s156, %s158
      %p162 = scmp.eq.s32.totalorder %s17, 0
      %p163 = por %p161, %p162
      %p164 = scmp.ne.s32.totalorder %s156, %s158
      %p165 = scmp.eq.s32.totalorder %s22, 3
      %p166 = por %p164, %p165
      %p167 = scmp.ne.s32.totalorder %s158, %s159
      %p168 = scmp.eq.s32.totalorder %s22, 0
      %p169 = por %p167, %p168
      %p170 = scmp.ne.s32.totalorder %s158, %s159
      %p171 = scmp.eq.s32.totalorder %s23, 3
      %p172 = por %p170, %p171
      %p174 = scmp.ne.s32.totalorder %s159, %s173
      %p175 = scmp.eq.s32.totalorder %s23, 0
      %p176 = por %p174, %p175
      %s177 = ssub.s32 %s17, %s24
      %p178 = scmp.eq.s32.totalorder %s177, 0
      %s180 = sadd.s32 %s179, 1
      %s181 = scalar_select %p178, %s179, %s180
      %p184 = pneg %p178
      %p185 = scmp.eq.s32.totalorder %s17, 3
      %p186 = por %p184, %p185
      %p187 = scmp.ne.s32.totalorder %s179, %s182
      %p188 = scmp.eq.s32.totalorder %s17, 0
      %p189 = por %p187, %p188
      %p190 = scmp.ne.s32.totalorder %s179, %s182
      %p191 = scmp.eq.s32.totalorder %s22, 3
      %p192 = por %p190, %p191
      %p193 = scmp.ne.s32.totalorder %s182, %s183
      %p194 = scmp.eq.s32.totalorder %s22, 0
      %p195 = por %p193, %p194
      %p196 = scmp.ne.s32.totalorder %s182, %s183
      %p197 = scmp.eq.s32.totalorder %s23, 3
      %p198 = por %p196, %p197
      %p200 = scmp.ne.s32.totalorder %s183, %s199
      %p201 = scmp.eq.s32.totalorder %s23, 0
      %p202 = por %p200, %p201
      %p203 = scmp.le.s32.totalorder 1, %s17
      %p204 = scmp.lt.s32.totalorder %s17, 5
      %p205 = pnand %p203, %p204
      %p206 = pneg %p205
      // Predicated region
      $region9: #{tpu_custom_call.1} parent=5 // pred_check
        _
      $region10: #{tpu_custom_call.1} parent=5 // pred_check_branch
        %208 = sbr.rel (%p205) target = $region12
      $region11: #{tpu_custom_call.1} parent=5 // pred_region
        %s209 = ssub.s32 %s17, 1
        // Predicated region
        $region13: #{tpu_custom_call.1} parent=11 // pred_check
          %p210 = pneg %p64
        $region14: #{tpu_custom_call.1} parent=11 // pred_check_branch
          %212 = sbr.rel (%p210) target = $region16
        $region15: #{tpu_custom_call.1} parent=11 // pred_region
          _
        $region16: #{tpu_custom_call.1} parent=11 // pred_fallthru
          _
        // Predicated region
        $region17: #{tpu_custom_call.1} parent=11 // pred_check
          %p213 = pneg %p85
        $region18: #{tpu_custom_call.1} parent=11 // pred_check_branch
          %215 = sbr.rel (%p213) target = $region20
        $region19: #{tpu_custom_call.1} parent=11 // pred_region
          _
        $region20: #{tpu_custom_call.1} parent=11 // pred_fallthru
          _
        // Predicated region
        $region21: #{tpu_custom_call.1} parent=11 // pred_check
          %p216 = pneg %p106
        $region22: #{tpu_custom_call.1} parent=11 // pred_check_branch
          %218 = sbr.rel (%p216) target = $region24
        $region23: #{tpu_custom_call.1} parent=11 // pred_region
          _
        $region24: #{tpu_custom_call.1} parent=11 // pred_fallthru
          _
        // Predicated region
        $region25: #{tpu_custom_call.1} parent=11 // pred_check
          %p219 = pneg %p127
        $region26: #{tpu_custom_call.1} parent=11 // pred_check_branch
          %221 = sbr.rel (%p219) target = $region28
        $region27: #{tpu_custom_call.1} parent=11 // pred_region
          _
        $region28: #{tpu_custom_call.1} parent=11 // pred_fallthru
          _
        // Predicated region
        $region29: #{tpu_custom_call.1} parent=11 // pred_check
          %p222 = pneg %p148
        $region30: #{tpu_custom_call.1} parent=11 // pred_check_branch
          %224 = sbr.rel (%p222) target = $region32
        $region31: #{tpu_custom_call.1} parent=11 // pred_region
          _
        $region32: #{tpu_custom_call.1} parent=11 // pred_fallthru
          _
        // Predicated region
        $region33: #{tpu_custom_call.1} parent=11 // pred_check
          %p225 = pneg %p169
        $region34: #{tpu_custom_call.1} parent=11 // pred_check_branch
          %227 = sbr.rel (%p225) target = $region36
        $region35: #{tpu_custom_call.1} parent=11 // pred_region
          _
        $region36: #{tpu_custom_call.1} parent=11 // pred_fallthru
          _
      $region12: #{tpu_custom_call.1} parent=5 // pred_fallthru
        _
      %p228 = scmp.lt.s32.totalorder %s17, 4
      // Predicated region
      $region37: #{tpu_custom_call.1} parent=5 // pred_check
        %p229 = pneg %p228
      $region38: #{tpu_custom_call.1} parent=5 // pred_check_branch
        %231 = sbr.rel (%p229) target = $region40
      $region39: #{tpu_custom_call.1} parent=5 // pred_region
        // Predicated region
        $region41: #{tpu_custom_call.1} parent=39 // pred_check
          %p232 = pneg %p37
        $region42: #{tpu_custom_call.1} parent=39 // pred_check_branch
          %234 = sbr.rel (%p232) target = $region44
        $region43: #{tpu_custom_call.1} parent=39 // pred_region
          %s235 = smul.u32 16, %s17
          %p236 = scmp.lt.s32.totalorder %s235, 63
          %s237 = scalar_select %p236, %s235, 63
          %s238 = smul.addr %s237, 8
          %s239 = scalar_lea.vmem %s0, %s238
          %s240 = smul.u32 16, %s17
        $region44: #{tpu_custom_call.1} parent=39 // pred_fallthru
          _
      $region40: #{tpu_custom_call.1} parent=5 // pred_fallthru
        _
      %p241 = scmp.le.s32.totalorder 1, %s17
      %p242 = scmp.lt.s32.totalorder %s17, 5
      %p243 = pnand %p241, %p242
      %p244 = pneg %p243
      // Predicated region
      $region45: #{tpu_custom_call.1} parent=5 // pred_check
        _
      $region46: #{tpu_custom_call.1} parent=5 // pred_check_branch
        %246 = sbr.rel (%p243) target = $region48
      $region47: #{tpu_custom_call.1} parent=5 // pred_region
        %s247 = ssub.s32 %s17, 1
        %s248 = smul.u32 16, %s22
        %p249 = scmp.lt.s32.totalorder %s248, 63
        %s250 = scalar_select %p249, %s248, 63
        %s251 = smul.addr %s250, 8
        %s252 = scalar_lea.vmem %s0, %s251
        %p253 = pneg %p43
        %p254 = pneg %p40
        %p255 = pneg %p64
        %p256 = pneg %p61
        %p257 = pneg %p85
        %p258 = pneg %p82
        %p259 = pneg %p106
        %p260 = pneg %p103
        %p261 = pneg %p127
        %p262 = pneg %p124
        %p263 = pneg %p148
        %p264 = pneg %p145
        %p265 = pneg %p169
        %p266 = pneg %p166
        %p267 = pneg %p195
        %p268 = pneg %p192
        %s269 = sand.u32 %s182, 1
        %s270 = scalar_lea.sflag [#allocation4], %s269
        %s271 = sand.u32 %s182, 1
        %s272 = scalar_lea.vmem [#allocation3], %s271
        %s273 = smul.u32 16, %s22
        %p274 = scmp.lt.s32.totalorder %s273, 63
        %s275 = scalar_select %p274, %s273, 63
        %s276 = smul.addr %s275, 8
        %s277 = scalar_lea.vmem %s0, %s276
        %s278 = smul.u32 16, %s22
        %v279 = vld [vmem:[%s277] sm:$0xff]
        %v280 = vld [vmem:[%s277 + $0x8] sm:$0xff]
        %v281 = vld [vmem:[%s277 + $0x10] sm:$0xff]
        %v282 = vld [vmem:[%s277 + $0x18] sm:$0xff]
        %v283 = vld [vmem:[%s277 + $0x20] sm:$0xff]
        %v284 = vld [vmem:[%s277 + $0x28] sm:$0xff]
        %v285 = vld [vmem:[%s277 + $0x30] sm:$0xff]
        %v286 = vld [vmem:[%s277 + $0x38] sm:$0xff]
        %v287 = vld [vmem:[%s277 + $0x40] sm:$0xff]
        %v288 = vld [vmem:[%s277 + $0x48] sm:$0xff]
        %v289 = vld [vmem:[%s277 + $0x50] sm:$0xff]
        %v290 = vld [vmem:[%s277 + $0x58] sm:$0xff]
        %v291 = vld [vmem:[%s277 + $0x60] sm:$0xff]
        %v292 = vld [vmem:[%s277 + $0x68] sm:$0xff]
        %v293 = vld [vmem:[%s277 + $0x70] sm:$0xff]
        %v294 = vld [vmem:[%s277 + $0x78] sm:$0xff]
        %v295 = vld [vmem:[%s1] sm:$0xff]
        %v296 = vld [vmem:[%s1 + $0x8] sm:$0xff]
        %v297 = vld [vmem:[%s1 + $0x10] sm:$0xff]
        %v298 = vld [vmem:[%s1 + $0x18] sm:$0xff]
        %v299 = vld [vmem:[%s2] sm:$0x1]
        %v301 = vlaneseq
        %v302 = vshrl.u32 %v301, 7
        %v303 = vsub.s32 0, %v302
        %v304 = vrot.slane %v299, %v303
        %vm306 = vcmask 261120
        %v308 = vsel %vm306, %v279, 0
        %v311 = vsel %vm306, %v280, 0
        %v314 = vsel %vm306, %v281, 0
        %v317 = vsel %vm306, %v282, 0
        %v320 = vsel %vm306, %v283, 0
        %v323 = vsel %vm306, %v284, 0
        %v326 = vsel %vm306, %v285, 0
        %v329 = vsel %vm306, %v286, 0
        %v332 = vsel %vm306, %v287, 0
        %v335 = vsel %vm306, %v288, 0
        %v338 = vsel %vm306, %v289, 0
        %v341 = vsel %vm306, %v290, 0
        %v344 = vsel %vm306, %v291, 0
        %v347 = vsel %vm306, %v292, 0
        %v350 = vsel %vm306, %v293, 0
        %v353 = vsel %vm306, %v294, 0
        %355 = vmatprep.subr.mxu0 0.0
        %356 = vmatpush1.msra.mxu0 %v295
        %357 = vmatprep.subr.mxu0 0.0
        %358 = vmatpush1.msra.mxu0 %v296
        %359 = vmatprep.subr.mxu0 0.0
        %360 = vmatpush1.msra.mxu0 %v297
        %361 = vmatprep.subr.mxu0 0.0
        %362 = vmatpush1.msra.mxu0 %v298
        %363 = vmatprep.subr.mxu0 0.0
        %364 = vmatpush1.msra.mxu0 0.0
        %365 = vmatprep.subr.mxu0 0.0
        %366 = vmatpush1.msra.mxu0 0.0
        %367 = vmatprep.subr.mxu0 0.0
        %368 = vmatpush1.msra.mxu0 0.0
        %369 = vmatprep.subr.mxu0 0.0
        %370 = vmatpush1.msra.mxu0 0.0
        %371 = vmatprep.subr.mxu0 0.0
        %372 = vmatpush1.msra.mxu0 0.0
        %373 = vmatprep.subr.mxu0 0.0
        %374 = vmatpush1.msra.mxu0 0.0
        %375 = vmatprep.subr.mxu0 0.0
        %376 = vmatpush1.msra.mxu0 0.0
        %377 = vmatprep.subr.mxu0 0.0
        %378 = vmatpush1.msra.mxu0 0.0
        %379 = vmatprep.subr.mxu0 0.0
        %380 = vmatpush1.msra.mxu0 0.0
        %381 = vmatprep.subr.mxu0 0.0
        %382 = vmatpush1.msra.mxu0 0.0
        %383 = vmatprep.subr.mxu0 0.0
        %384 = vmatpush1.msra.mxu0 0.0
        %385 = vmatprep.subr.mxu0 0.0
        %386 = vmatpush1.msra.mxu0 0.0
        %387 = vmatprep.subr.mxu0 0.0
        %388 = vmatpush1.msra.mxu0 0.0
        %389 = vmatprep.subr.mxu0 0.0
        %390 = vmatpush1.msra.mxu0 0.0
        %391 = vmatprep.subr.mxu0 0.0
        %392 = vmatpush1.msra.mxu0 0.0
        %393 = vmatprep.subr.mxu0 0.0
        %394 = vmatpush1.msra.mxu0 0.0
        %395 = vmatprep.subr.mxu0 0.0
        %396 = vmatpush1.msra.mxu0 0.0
        %397 = vmatprep.subr.mxu0 0.0
        %398 = vmatpush1.msra.mxu0 0.0
        %399 = vmatprep.subr.mxu0 0.0
        %400 = vmatpush1.msra.mxu0 0.0
        %401 = vmatprep.subr.mxu0 0.0
        %402 = vmatpush1.msra.mxu0 0.0
        %403 = vmatprep.subr.mxu0 0.0
        %404 = vmatpush1.msra.mxu0 0.0
        %405 = vmatprep.subr.mxu0 0.0
        %406 = vmatpush1.msra.mxu0 0.0
        %407 = vmatprep.subr.mxu0 0.0
        %408 = vmatpush1.msra.mxu0 0.0
        %409 = vmatprep.subr.mxu0 0.0
        %410 = vmatpush1.msra.mxu0 0.0
        %411 = vmatprep.subr.mxu0 0.0
        %412 = vmatpush1.msra.mxu0 0.0
        %413 = vmatprep.subr.mxu0 0.0
        %414 = vmatpush1.msra.mxu0 0.0
        %415 = vmatprep.subr.mxu0 0.0
        %416 = vmatpush1.msra.mxu0 0.0
        %417 = vmatprep.subr.mxu0 0.0
        %418 = vmatpush1.msra.mxu0 0.0
        %419 = vmatprep.mubr.f32.mxu0 0.0
        %420 = vmatmul.mubr.f32.gmra.mrb[0].mxu0 %v308
        %v421 = vpop.f32.mrb[0].mxu0
        %v422 = vadd.f32 %v304, %v421
        %v423 = vpop.f32.mrb[0].mxu0
        %424 = vmatprep.mubr.f32.mxu0 0.0
        %425 = vmatmul.mubr.f32.gmra.mrb[0].mxu0 %v311
        %v426 = vpop.f32.mrb[0].mxu0
        %v427 = vadd.f32 %v304, %v426
        %v428 = vpop.f32.mrb[0].mxu0
        %429 = vmatprep.mubr.f32.mxu0 0.0
        %430 = vmatmul.mubr.f32.gmra.mrb[0].mxu0 %v314
        %v431 = vpop.f32.mrb[0].mxu0
        %v432 = vadd.f32 %v304, %v431
        %v433 = vpop.f32.mrb[0].mxu0
        %434 = vmatprep.mubr.f32.mxu0 0.0
        %435 = vmatmul.mubr.f32.gmra.mrb[0].mxu0 %v317
        %v436 = vpop.f32.mrb[0].mxu0
        %v437 = vadd.f32 %v304, %v436
        %v438 = vpop.f32.mrb[0].mxu0
        %439 = vmatprep.mubr.f32.mxu0 0.0
        %440 = vmatmul.mubr.f32.gmra.mrb[0].mxu0 %v320
        %v441 = vpop.f32.mrb[0].mxu0
        %v442 = vadd.f32 %v304, %v441
        %v443 = vpop.f32.mrb[0].mxu0
        %444 = vmatprep.mubr.f32.mxu0 0.0
        %445 = vmatmul.mubr.f32.gmra.mrb[0].mxu0 %v323
        %v446 = vpop.f32.mrb[0].mxu0
        %v447 = vadd.f32 %v304, %v446
        %v448 = vpop.f32.mrb[0].mxu0
        %449 = vmatprep.mubr.f32.mxu0 0.0
        %450 = vmatmul.mubr.f32.gmra.mrb[0].mxu0 %v326
        %v451 = vpop.f32.mrb[0].mxu0
        %v452 = vadd.f32 %v304, %v451
        %v453 = vpop.f32.mrb[0].mxu0
        %454 = vmatprep.mubr.f32.mxu0 0.0
        %455 = vmatmul.mubr.f32.gmra.mrb[0].mxu0 %v329
        %v456 = vpop.f32.mrb[0].mxu0
        %v457 = vadd.f32 %v304, %v456
        %v458 = vpop.f32.mrb[0].mxu0
        %459 = vmatprep.mubr.f32.mxu0 0.0
        %460 = vmatmul.mubr.f32.gmra.mrb[0].mxu0 %v332
        %v461 = vpop.f32.mrb[0].mxu0
        %v462 = vadd.f32 %v304, %v461
        %v463 = vpop.f32.mrb[0].mxu0
        %464 = vmatprep.mubr.f32.mxu0 0.0
        %465 = vmatmul.mubr.f32.gmra.mrb[0].mxu0 %v335
        %v466 = vpop.f32.mrb[0].mxu0
        %v467 = vadd.f32 %v304, %v466
        %v468 = vpop.f32.mrb[0].mxu0
        %469 = vmatprep.mubr.f32.mxu0 0.0
        %470 = vmatmul.mubr.f32.gmra.mrb[0].mxu0 %v338
        %v471 = vpop.f32.mrb[0].mxu0
        %v472 = vadd.f32 %v304, %v471
        %v473 = vpop.f32.mrb[0].mxu0
        %474 = vmatprep.mubr.f32.mxu0 0.0
        %475 = vmatmul.mubr.f32.gmra.mrb[0].mxu0 %v341
        %v476 = vpop.f32.mrb[0].mxu0
        %v477 = vadd.f32 %v304, %v476
        %v478 = vpop.f32.mrb[0].mxu0
        %479 = vmatprep.mubr.f32.mxu0 0.0
        %480 = vmatmul.mubr.f32.gmra.mrb[0].mxu0 %v344
        %v481 = vpop.f32.mrb[0].mxu0
        %v482 = vadd.f32 %v304, %v481
        %v483 = vpop.f32.mrb[0].mxu0
        %484 = vmatprep.mubr.f32.mxu0 0.0
        %485 = vmatmul.mubr.f32.gmra.mrb[0].mxu0 %v347
        %v486 = vpop.f32.mrb[0].mxu0
        %v487 = vadd.f32 %v304, %v486
        %v488 = vpop.f32.mrb[0].mxu0
        %489 = vmatprep.mubr.f32.mxu0 0.0
        %490 = vmatmul.mubr.f32.gmra.mrb[0].mxu0 %v350
        %v491 = vpop.f32.mrb[0].mxu0
        %v492 = vadd.f32 %v304, %v491
        %v493 = vpop.f32.mrb[0].mxu0
        %494 = vmatprep.mubr.f32.mxu0 0.0
        %495 = vmatmul.mubr.f32.gmra.mrb[0].mxu0 %v353
        %v496 = vpop.f32.mrb[0].mxu0
        %v497 = vadd.f32 %v304, %v496
        %v498 = vpop.f32.mrb[0].mxu0
        %499 = vdwg.mxu0
        %v500 = vmax.f32 %v422, 0.0
        %v501 = vmax.f32 %v427, 0.0
        %v502 = vmax.f32 %v432, 0.0
        %v503 = vmax.f32 %v437, 0.0
        %v504 = vmax.f32 %v442, 0.0
        %v505 = vmax.f32 %v447, 0.0
        %v506 = vmax.f32 %v452, 0.0
        %v507 = vmax.f32 %v457, 0.0
        %v508 = vmax.f32 %v462, 0.0
        %v509 = vmax.f32 %v467, 0.0
        %v510 = vmax.f32 %v472, 0.0
        %v511 = vmax.f32 %v477, 0.0
        %v512 = vmax.f32 %v482, 0.0
        %v513 = vmax.f32 %v487, 0.0
        %v514 = vmax.f32 %v492, 0.0
        %v515 = vmax.f32 %v497, 0.0
        %v516 = vld [vmem:[%s3] sm:$0xff]
        %v517 = vld [vmem:[%s3 + $0x8] sm:$0xff]
        %v518 = vld [vmem:[%s3 + $0x10] sm:$0xff]
        %v519 = vld [vmem:[%s3 + $0x18] sm:$0xff]
        %v520 = vld [vmem:[%s3 + $0x20] sm:$0xff]
        %v521 = vld [vmem:[%s3 + $0x28] sm:$0xff]
        %v522 = vld [vmem:[%s3 + $0x30] sm:$0xff]
        %v523 = vld [vmem:[%s3 + $0x38] sm:$0xff]
        %v524 = vld [vmem:[%s4] sm:$0x1]
        %v526 = vlaneseq
        %v527 = vshrl.u32 %v526, 7
        %v528 = vsub.s32 0, %v527
        %v529 = vrot.slane %v524, %v528
        %vm531 = vcmask 523264
        %v533 = vsel %vm531, %v500, 0
        %v536 = vsel %vm531, %v501, 0
        %v539 = vsel %vm531, %v502, 0
        %v542 = vsel %vm531, %v503, 0
        %v545 = vsel %vm531, %v504, 0
        %v548 = vsel %vm531, %v505, 0
        %v551 = vsel %vm531, %v506, 0
        %v554 = vsel %vm531, %v507, 0
        %v557 = vsel %vm531, %v508, 0
        %v560 = vsel %vm531, %v509, 0
        %v563 = vsel %vm531, %v510, 0
        %v566 = vsel %vm531, %v511, 0
        %v569 = vsel %vm531, %v512, 0
        %v572 = vsel %vm531, %v513, 0
        %v575 = vsel %vm531, %v514, 0
        %v578 = vsel %vm531, %v515, 0
        %580 = vmatprep.subr.mxu0 0.0
        %581 = vmatpush1.msra.mxu0 %v516
        %582 = vmatprep.subr.mxu0 0.0
        %583 = vmatpush1.msra.mxu0 %v517
        %584 = vmatprep.subr.mxu0 0.0
        %585 = vmatpush1.msra.mxu0 %v518
        %586 = vmatprep.subr.mxu0 0.0
        %587 = vmatpush1.msra.mxu0 %v519
        %588 = vmatprep.subr.mxu0 0.0
        %589 = vmatpush1.msra.mxu0 %v520
        %590 = vmatprep.subr.mxu0 0.0
        %591 = vmatpush1.msra.mxu0 %v521
        %592 = vmatprep.subr.mxu0 0.0
        %593 = vmatpush1.msra.mxu0 %v522
        %594 = vmatprep.subr.mxu0 0.0
        %595 = vmatpush1.msra.mxu0 %v523
        %596 = vmatprep.subr.mxu0 0.0
        %597 = vmatpush1.msra.mxu0 0.0
        %598 = vmatprep.subr.mxu0 0.0
        %599 = vmatpush1.msra.mxu0 0.0
        %600 = vmatprep.subr.mxu0 0.0
        %601 = vmatpush1.msra.mxu0 0.0
        %602 = vmatprep.subr.mxu0 0.0
        %603 = vmatpush1.msra.mxu0 0.0
        %604 = vmatprep.subr.mxu0 0.0
        %605 = vmatpush1.msra.mxu0 0.0
        %606 = vmatprep.subr.mxu0 0.0
        %607 = vmatpush1.msra.mxu0 0.0
        %608 = vmatprep.subr.mxu0 0.0
        %609 = vmatpush1.msra.mxu0 0.0
        %610 = vmatprep.subr.mxu0 0.0
        %611 = vmatpush1.msra.mxu0 0.0
        %612 = vmatprep.subr.mxu0 0.0
        %613 = vmatpush1.msra.mxu0 0.0
        %614 = vmatprep.subr.mxu0 0.0
        %615 = vmatpush1.msra.mxu0 0.0
        %616 = vmatprep.subr.mxu0 0.0
        %617 = vmatpush1.msra.mxu0 0.0
        %618 = vmatprep.subr.mxu0 0.0
        %619 = vmatpush1.msra.mxu0 0.0
        %620 = vmatprep.subr.mxu0 0.0
        %621 = vmatpush1.msra.mxu0 0.0
        %622 = vmatprep.subr.mxu0 0.0
        %623 = vmatpush1.msra.mxu0 0.0
        %624 = vmatprep.subr.mxu0 0.0
        %625 = vmatpush1.msra.mxu0 0.0
        %626 = vmatprep.subr.mxu0 0.0
        %627 = vmatpush1.msra.mxu0 0.0
        %628 = vmatprep.subr.mxu0 0.0
        %629 = vmatpush1.msra.mxu0 0.0
        %630 = vmatprep.subr.mxu0 0.0
        %631 = vmatpush1.msra.mxu0 0.0
        %632 = vmatprep.subr.mxu0 0.0
        %633 = vmatpush1.msra.mxu0 0.0
        %634 = vmatprep.subr.mxu0 0.0
        %635 = vmatpush1.msra.mxu0 0.0
        %636 = vmatprep.subr.mxu0 0.0
        %637 = vmatpush1.msra.mxu0 0.0
        %638 = vmatprep.subr.mxu0 0.0
        %639 = vmatpush1.msra.mxu0 0.0
        %640 = vmatprep.subr.mxu0 0.0
        %641 = vmatpush1.msra.mxu0 0.0
        %642 = vmatprep.subr.mxu0 0.0
        %643 = vmatpush1.msra.mxu0 0.0
        %644 = vmatprep.mubr.f32.mxu0 0.0
        %645 = vmatmul.mubr.f32.gmra.mrb[0].mxu0 %v533
        %v646 = vpop.f32.mrb[0].mxu0
        %v647 = vadd.f32 %v529, %v646
        %v648 = vpop.f32.mrb[0].mxu0
        %649 = vmatprep.mubr.f32.mxu0 0.0
        %650 = vmatmul.mubr.f32.gmra.mrb[0].mxu0 %v536
        %v651 = vpop.f32.mrb[0].mxu0
        %v652 = vadd.f32 %v529, %v651
        %v653 = vpop.f32.mrb[0].mxu0
        %654 = vmatprep.mubr.f32.mxu0 0.0
        %655 = vmatmul.mubr.f32.gmra.mrb[0].mxu0 %v539
        %v656 = vpop.f32.mrb[0].mxu0
        %v657 = vadd.f32 %v529, %v656
        %v658 = vpop.f32.mrb[0].mxu0
        %659 = vmatprep.mubr.f32.mxu0 0.0
        %660 = vmatmul.mubr.f32.gmra.mrb[0].mxu0 %v542
        %v661 = vpop.f32.mrb[0].mxu0
        %v662 = vadd.f32 %v529, %v661
        %v663 = vpop.f32.mrb[0].mxu0
        %664 = vmatprep.mubr.f32.mxu0 0.0
        %665 = vmatmul.mubr.f32.gmra.mrb[0].mxu0 %v545
        %v666 = vpop.f32.mrb[0].mxu0
        %v667 = vadd.f32 %v529, %v666
        %v668 = vpop.f32.mrb[0].mxu0
        %669 = vmatprep.mubr.f32.mxu0 0.0
        %670 = vmatmul.mubr.f32.gmra.mrb[0].mxu0 %v548
        %v671 = vpop.f32.mrb[0].mxu0
        %v672 = vadd.f32 %v529, %v671
        %v673 = vpop.f32.mrb[0].mxu0
        %674 = vmatprep.mubr.f32.mxu0 0.0
        %675 = vmatmul.mubr.f32.gmra.mrb[0].mxu0 %v551
        %v676 = vpop.f32.mrb[0].mxu0
        %v677 = vadd.f32 %v529, %v676
        %v678 = vpop.f32.mrb[0].mxu0
        %679 = vmatprep.mubr.f32.mxu0 0.0
        %680 = vmatmul.mubr.f32.gmra.mrb[0].mxu0 %v554
        %v681 = vpop.f32.mrb[0].mxu0
        %v682 = vadd.f32 %v529, %v681
        %v683 = vpop.f32.mrb[0].mxu0
        %684 = vmatprep.mubr.f32.mxu0 0.0
        %685 = vmatmul.mubr.f32.gmra.mrb[0].mxu0 %v557
        %v686 = vpop.f32.mrb[0].mxu0
        %v687 = vadd.f32 %v529, %v686
        %v688 = vpop.f32.mrb[0].mxu0
        %689 = vmatprep.mubr.f32.mxu0 0.0
        %690 = vmatmul.mubr.f32.gmra.mrb[0].mxu0 %v560
        %v691 = vpop.f32.mrb[0].mxu0
        %v692 = vadd.f32 %v529, %v691
        %v693 = vpop.f32.mrb[0].mxu0
        %694 = vmatprep.mubr.f32.mxu0 0.0
        %695 = vmatmul.mubr.f32.gmra.mrb[0].mxu0 %v563
        %v696 = vpop.f32.mrb[0].mxu0
        %v697 = vadd.f32 %v529, %v696
        %v698 = vpop.f32.mrb[0].mxu0
        %699 = vmatprep.mubr.f32.mxu0 0.0
        %700 = vmatmul.mubr.f32.gmra.mrb[0].mxu0 %v566
        %v701 = vpop.f32.mrb[0].mxu0
        %v702 = vadd.f32 %v529, %v701
        %v703 = vpop.f32.mrb[0].mxu0
        %704 = vmatprep.mubr.f32.mxu0 0.0
        %705 = vmatmul.mubr.f32.gmra.mrb[0].mxu0 %v569
        %v706 = vpop.f32.mrb[0].mxu0
        %v707 = vadd.f32 %v529, %v706
        %v708 = vpop.f32.mrb[0].mxu0
        %709 = vmatprep.mubr.f32.mxu0 0.0
        %710 = vmatmul.mubr.f32.gmra.mrb[0].mxu0 %v572
        %v711 = vpop.f32.mrb[0].mxu0
        %v712 = vadd.f32 %v529, %v711
        %v713 = vpop.f32.mrb[0].mxu0
        %714 = vmatprep.mubr.f32.mxu0 0.0
        %715 = vmatmul.mubr.f32.gmra.mrb[0].mxu0 %v575
        %v716 = vpop.f32.mrb[0].mxu0
        %v717 = vadd.f32 %v529, %v716
        %v718 = vpop.f32.mrb[0].mxu0
        %719 = vmatprep.mubr.f32.mxu0 0.0
        %720 = vmatmul.mubr.f32.gmra.mrb[0].mxu0 %v578
        %v721 = vpop.f32.mrb[0].mxu0
        %v722 = vadd.f32 %v529, %v721
        %v723 = vpop.f32.mrb[0].mxu0
        %724 = vdwg.mxu0
        %v725 = vmax.f32 %v647, 0.0
        %v726 = vmax.f32 %v652, 0.0
        %v727 = vmax.f32 %v657, 0.0
        %v728 = vmax.f32 %v662, 0.0
        %v729 = vmax.f32 %v667, 0.0
        %v730 = vmax.f32 %v672, 0.0
        %v731 = vmax.f32 %v677, 0.0
        %v732 = vmax.f32 %v682, 0.0
        %v733 = vmax.f32 %v687, 0.0
        %v734 = vmax.f32 %v692, 0.0
        %v735 = vmax.f32 %v697, 0.0
        %v736 = vmax.f32 %v702, 0.0
        %v737 = vmax.f32 %v707, 0.0
        %v738 = vmax.f32 %v712, 0.0
        %v739 = vmax.f32 %v717, 0.0
        %v740 = vmax.f32 %v722, 0.0
        %v741 = vld [vmem:[%s5] sm:$0x1]
        %s742 = sld [smem:[#allocation2]]
        %v743 = vstv %s742
        %v745 = vsel %vm306, %v741, 0
        %v748 = vsel %vm306, %v725, 0
        %v751 = vsel %vm306, %v726, 0
        %v754 = vsel %vm306, %v727, 0
        %v757 = vsel %vm306, %v728, 0
        %v760 = vsel %vm306, %v729, 0
        %v763 = vsel %vm306, %v730, 0
        %v766 = vsel %vm306, %v731, 0
        %v769 = vsel %vm306, %v732, 0
        %v772 = vsel %vm306, %v733, 0
        %v775 = vsel %vm306, %v734, 0
        %v778 = vsel %vm306, %v735, 0
        %v781 = vsel %vm306, %v736, 0
        %v784 = vsel %vm306, %v737, 0
        %v787 = vsel %vm306, %v738, 0
        %v790 = vsel %vm306, %v739, 0
        %v793 = vsel %vm306, %v740, 0
        %795 = vmatprep.subr.mxu0 0.0
        %796 = vmatpush1.xpose.msra.mxu0 %v748
        %797 = vmatprep.subr.mxu0 0.0
        %798 = vmatpush1.xpose.msra.mxu0 %v751
        %799 = vmatprep.subr.mxu0 0.0
        %800 = vmatpush1.xpose.msra.mxu0 %v754
        %801 = vmatprep.subr.mxu0 0.0
        %802 = vmatpush1.xpose.msra.mxu0 %v757
        %803 = vmatprep.subr.mxu0 0.0
        %804 = vmatpush1.xpose.msra.mxu0 %v760
        %805 = vmatprep.subr.mxu0 0.0
        %806 = vmatpush1.xpose.msra.mxu0 %v763
        %807 = vmatprep.subr.mxu0 0.0
        %808 = vmatpush1.xpose.msra.mxu0 %v766
        %809 = vmatprep.subr.mxu0 0.0
        %810 = vmatpush1.xpose.msra.mxu0 %v769
        %811 = vmatprep.subr.mxu0 0.0
        %812 = vmatpush1.xpose.msra.mxu0 %v772
        %813 = vmatprep.subr.mxu0 0.0
        %814 = vmatpush1.xpose.msra.mxu0 %v775
        %815 = vmatprep.subr.mxu0 0.0
        %816 = vmatpush1.xpose.msra.mxu0 %v778
        %817 = vmatprep.subr.mxu0 0.0
        %818 = vmatpush1.xpose.msra.mxu0 %v781
        %819 = vmatprep.subr.mxu0 0.0
        %820 = vmatpush1.xpose.msra.mxu0 %v784
        %821 = vmatprep.subr.mxu0 0.0
        %822 = vmatpush1.xpose.msra.mxu0 %v787
        %823 = vmatprep.subr.mxu0 0.0
        %824 = vmatpush1.xpose.msra.mxu0 %v790
        %825 = vmatprep.subr.mxu0 0.0
        %826 = vmatpush1.xpose.msra.mxu0 %v793
        %827 = vmatprep.subr.mxu0 0.0
        %828 = vmatpush1.xpose.msra.mxu0 0.0
        %829 = vmatprep.subr.mxu0 0.0
        %830 = vmatpush1.xpose.msra.mxu0 0.0
        %831 = vmatprep.subr.mxu0 0.0
        %832 = vmatpush1.xpose.msra.mxu0 0.0
        %833 = vmatprep.subr.mxu0 0.0
        %834 = vmatpush1.xpose.msra.mxu0 0.0
        %835 = vmatprep.subr.mxu0 0.0
        %836 = vmatpush1.xpose.msra.mxu0 0.0
        %837 = vmatprep.subr.mxu0 0.0
        %838 = vmatpush1.xpose.msra.mxu0 0.0
        %839 = vmatprep.subr.mxu0 0.0
        %840 = vmatpush1.xpose.msra.mxu0 0.0
        %841 = vmatprep.subr.mxu0 0.0
        %842 = vmatpush1.xpose.msra.mxu0 0.0
        %843 = vmatprep.subr.mxu0 0.0
        %844 = vmatpush1.xpose.msra.mxu0 0.0
        %845 = vmatprep.subr.mxu0 0.0
        %846 = vmatpush1.xpose.msra.mxu0 0.0
        %847 = vmatprep.subr.mxu0 0.0
        %848 = vmatpush1.xpose.msra.mxu0 0.0
        %849 = vmatprep.subr.mxu0 0.0
        %850 = vmatpush1.xpose.msra.mxu0 0.0
        %851 = vmatprep.subr.mxu0 0.0
        %852 = vmatpush1.xpose.msra.mxu0 0.0
        %853 = vmatprep.subr.mxu0 0.0
        %854 = vmatpush1.xpose.msra.mxu0 0.0
        %855 = vmatprep.subr.mxu0 0.0
        %856 = vmatpush1.xpose.msra.mxu0 0.0
        %857 = vmatprep.subr.mxu0 0.0
        %858 = vmatpush1.xpose.msra.mxu0 0.0
        %859 = vmatprep.mubr.f32.mxu0 0.0
        %860 = vmatmul.mubr.f32.gmra.mrb[0].mxu0 %v745
        %v861 = vpop.f32.mrb[0].mxu0
        %v862 = vadd.f32 %v743, %v861
        %v863 = vpop.f32.mrb[0].mxu0
        %864 = vdwg.mxu0
        %865 = vst [vmem:[%s272] sm:$0x1] %v862
        %s866 = sand.u32 %s182, 1
        %s867 = scalar_lea.sflag [#allocation4], %s866
        %s868 = sand.u32 %s182, 1
        %s869 = scalar_lea.vmem [#allocation3], %s868
        // Predicated region
        $region49: #{tpu_custom_call.1} parent=47 // pred_check
          %p870 = pneg %p192
        $region50: #{tpu_custom_call.1} parent=47 // pred_check_branch
          %872 = sbr.rel (%p870) target = $region52
        $region51: #{tpu_custom_call.1} parent=47 // pred_region
          %s874 = ssub.s32 16, 16
          %875 = vsyncadd %s867, %s874
          %s876 = smul.addr %s22, 16
          %s877 = scalar_lea.hbm %s7, %s876
          %s879 = sshll.u32 %s869, 4
          %s880 = int_to_ptr.vmem [resolvable:$true] %s879
          %882 = dma.vmem_to_hbm [thread:$0]  %s880, 16, %s877, %s867
        $region52: #{tpu_custom_call.1} parent=47 // pred_fallthru
          _
      $region48: #{tpu_custom_call.1} parent=5 // pred_fallthru
        _
      %p883 = scmp.le.s32.totalorder 2, %s17
      // Predicated region
      $region53: #{tpu_custom_call.1} parent=5 // pred_check
        %p884 = pneg %p883
      $region54: #{tpu_custom_call.1} parent=5 // pred_check_branch
        %886 = sbr.rel (%p884) target = $region56
      $region55: #{tpu_custom_call.1} parent=5 // pred_region
        %s887 = ssub.s32 %s17, 2
        // Predicated region
        $region57: #{tpu_custom_call.1} parent=55 // pred_check
          %p888 = pneg %p198
        $region58: #{tpu_custom_call.1} parent=55 // pred_check_branch
          %890 = sbr.rel (%p888) target = $region60
        $region59: #{tpu_custom_call.1} parent=55 // pred_region
          %s891 = sand.u32 %s183, 1
          %s892 = scalar_lea.sflag [#allocation4], %s891
          %s893 = sand.u32 %s183, 1
          %s894 = scalar_lea.vmem [#allocation3], %s893
          %895 = dma.done %s892, 16
        $region60: #{tpu_custom_call.1} parent=55 // pred_fallthru
          _
      $region56: #{tpu_custom_call.1} parent=5 // pred_fallthru
        _
    $region6: #{tpu_custom_call.1} parent=1 // loop_footer
      %s21 = sadd.s32 1, %s17
    $region7: #{tpu_custom_call.1} parent=1 // loop_footer_branch
      %16 = sbr.rel target = $region3
    $region8: #{tpu_custom_call.1} parent=1 // loop_exit
      _
    %896 = vsyncpa [#allocation4], 1
    %s897 = scalar_lea.sflag [#allocation4], 1
    %898 = vsyncpa %s897, 1

</llo_original>
